<compile_context>
chip_gen: v5e
topology: v5e:2x2
jax: 0.10.0
libtpu: 0.0.40
codegen_flags: <defaults>
</compile_context>

<pallas_src>
import jax
import jax.numpy as jnp
import numpy as np
from jax.experimental import pallas as pl
from jax.experimental.pallas import tpu as pltpu

# ---- static model dims (consistent with the module) ----
B = 2            # batch
LQ = 8           # graph (query) sequence length
LK = 16          # image-patch (key/value) sequence length
D_MODEL = 32     # d_model
NHEAD = 4
HEAD_DIM = D_MODEL // NHEAD
DIM_FF = 64      # dim_feedforward
SCALE = 1.0 / float(np.sqrt(HEAD_DIM))
EPS = 1e-5       # nn.LayerNorm default
NEG_INF = -1e9

BLQ = B * LQ     # 16  (batch stacked on sublanes, query side)
BLK = B * LK     # 32  (batch stacked on sublanes, key side)

# ---- stacked activation operand layout: (XIN_R, XIN_C) f32, one DMA ----
# rows 0:16   cols  0:32  = q_in  (graph + graph_pos),  col 96 = 1
# rows 16:48  cols 32:64  = k_in  (image + patch_pos),  col 97 = 1
# rows 48:80  cols 64:96  = img   (image),              col 98 = 1
# rows 80:96  cols  0:32  = graph (residual stream)
XIN_R, XIN_C = 96, 128
ROW_Q, ROW_K, ROW_V, ROW_G = 0, 16, 48, 80
COL_ONE_Q, COL_ONE_K, COL_ONE_V = 96, 97, 98
QKV_K = 128      # contraction dim of the fused QKV dot

# ---- parameter slab layout: one (SLAB_R, SLAB_C) f32 array, one DMA ----
R_WQKV = 0       # rows 0:128, cols 0:32  (block-stacked wq*S / wk / wv + bias rows)
R_WO = 128       # (32,32)
R_W1 = 160       # (32,64)
R_W2 = 192       # (64,32)
R_BO = 256       # pre-broadcast to 16 rows, cols 0:32
R_B1 = 272       # pre-broadcast to 16 rows, cols 0:64
R_B2 = 288
R_G1 = 304
R_BE1 = 320
R_G2 = 336
R_BE2 = 352
SLAB_R, SLAB_C = 368, 64


def pack_params(p):
    """One-time parameter transform: pack all weights/biases/LN params into a
    single contiguous slab; fold the attention scale into Wq/bq; stack the QKV
    weights block-wise (with bias rows hit by the one-hot ones columns of the
    stacked input); pre-broadcast remaining biases / LN params over sublanes."""
    s = jnp.zeros((SLAB_R, SLAB_C), jnp.float32)
    # fused QKV weight: rows 0:32 wq*S, 32:64 wk, 64:96 wv, 96/97/98 bias rows
    s = s.at[R_WQKV + 0:R_WQKV + 32, 0:D_MODEL].set(p["wq"] * SCALE)
    s = s.at[R_WQKV + 32:R_WQKV + 64, 0:D_MODEL].set(p["wk"])
    s = s.at[R_WQKV + 64:R_WQKV + 96, 0:D_MODEL].set(p["wv"])
    s = s.at[R_WQKV + COL_ONE_Q, 0:D_MODEL].set((p["bq"] * SCALE).reshape(-1))
    s = s.at[R_WQKV + COL_ONE_K, 0:D_MODEL].set(p["bk"].reshape(-1))
    s = s.at[R_WQKV + COL_ONE_V, 0:D_MODEL].set(p["bv"].reshape(-1))
    s = s.at[R_WO:R_WO + D_MODEL, 0:D_MODEL].set(p["wo"])
    s = s.at[R_W1:R_W1 + D_MODEL, 0:DIM_FF].set(p["w1"])
    s = s.at[R_W2:R_W2 + DIM_FF, 0:D_MODEL].set(p["w2"])
    # pre-broadcast (no sublane broadcast needed in-kernel)
    s = s.at[R_BO:R_BO + BLQ, 0:D_MODEL].set(jnp.broadcast_to(p["bo"], (BLQ, D_MODEL)))
    s = s.at[R_B1:R_B1 + BLQ, 0:DIM_FF].set(jnp.broadcast_to(p["b1"], (BLQ, DIM_FF)))
    s = s.at[R_B2:R_B2 + BLQ, 0:D_MODEL].set(jnp.broadcast_to(p["b2"], (BLQ, D_MODEL)))
    s = s.at[R_G1:R_G1 + BLQ, 0:D_MODEL].set(jnp.broadcast_to(p["g1"], (BLQ, D_MODEL)))
    s = s.at[R_BE1:R_BE1 + BLQ, 0:D_MODEL].set(jnp.broadcast_to(p["be1"], (BLQ, D_MODEL)))
    s = s.at[R_G2:R_G2 + BLQ, 0:D_MODEL].set(jnp.broadcast_to(p["g2"], (BLQ, D_MODEL)))
    s = s.at[R_BE2:R_BE2 + BLQ, 0:D_MODEL].set(jnp.broadcast_to(p["be2"], (BLQ, D_MODEL)))
    return s


def decoder_layer_kernel(x_ref, bias_ref, w_ref, out_ref, o_scr):
    f32 = jnp.float32

    # ---- fused Q/K/V projection: ONE MXU dot, biases folded via ones cols ----
    qkv = jnp.dot(x_ref[0:ROW_G, :], w_ref[R_WQKV:R_WQKV + QKV_K, 0:D_MODEL],
                  preferred_element_type=f32)                 # (80, 32)
    q = qkv[0:BLQ, :]                     # (16,32) pre-scaled, bias included
    k = qkv[BLQ:BLQ + BLK, :]             # (32,32)
    v = qkv[BLQ + BLK:BLQ + 2 * BLK, :]   # (32,32)

    kT = k.T                              # single hoisted (32,32) transpose
    bias = bias_ref[...]                  # (16,32): key-padding + cross-batch mask

    # ---- per-head attention (both batch elements per matmul), static unroll ----
    for h in range(NHEAD):
        sl = slice(h * HEAD_DIM, (h + 1) * HEAD_DIM)
        s = jnp.dot(q[:, sl], kT[sl, :], preferred_element_type=f32) + bias  # (16,32)
        m = jnp.max(s, axis=-1, keepdims=True)
        p = jnp.exp(s - m)
        p = p * pl.reciprocal(jnp.sum(p, axis=-1, keepdims=True), approx=True)
        # head output written directly into the concat slot (masked store)
        o_scr[:, sl] = jnp.dot(p, v[:, sl], preferred_element_type=f32)

    # ---- fused output projection (one dot over all heads) ----
    attn = (jnp.dot(o_scr[...], w_ref[R_WO:R_WO + D_MODEL, 0:D_MODEL],
                    preferred_element_type=f32)
            + w_ref[R_BO:R_BO + BLQ, 0:D_MODEL])

    # ---- residual + LayerNorm1 ----
    g = x_ref[ROW_G:ROW_G + BLQ, 0:D_MODEL]        # residual stream (no pos)
    tgt = g + attn
    mu = jnp.mean(tgt, axis=-1, keepdims=True)
    var = jnp.mean((tgt - mu) ** 2, axis=-1, keepdims=True)
    tgt = ((tgt - mu) * jax.lax.rsqrt(var + EPS)
           * w_ref[R_G1:R_G1 + BLQ, 0:D_MODEL]
           + w_ref[R_BE1:R_BE1 + BLQ, 0:D_MODEL])

    # ---- feed-forward (relu) ----
    hid = (jnp.dot(tgt, w_ref[R_W1:R_W1 + D_MODEL, 0:DIM_FF],
                   preferred_element_type=f32)
           + w_ref[R_B1:R_B1 + BLQ, 0:DIM_FF])
    hid = jnp.maximum(hid, 0.0)
    ff = (jnp.dot(hid, w_ref[R_W2:R_W2 + DIM_FF, 0:D_MODEL],
                  preferred_element_type=f32)
          + w_ref[R_B2:R_B2 + BLQ, 0:D_MODEL])

    # ---- residual + LayerNorm2 ----
    tgt = tgt + ff
    mu = jnp.mean(tgt, axis=-1, keepdims=True)
    var = jnp.mean((tgt - mu) ** 2, axis=-1, keepdims=True)
    tgt = ((tgt - mu) * jax.lax.rsqrt(var + EPS)
           * w_ref[R_G2:R_G2 + BLQ, 0:D_MODEL]
           + w_ref[R_BE2:R_BE2 + BLQ, 0:D_MODEL])

    out_ref[...] = tgt.astype(out_ref.dtype)


@jax.jit
def transformer_decoder_layer(graph_emb, graph_pos, image_emb, patch_pos,
                              patch_mask, slab):
    """patch_mask: bool (B, LK), True = ignore key (key_padding_mask)."""
    q_in = (graph_emb + graph_pos).reshape(BLQ, D_MODEL)
    k_in = (image_emb + patch_pos).reshape(BLK, D_MODEL)
    img2d = image_emb.reshape(BLK, D_MODEL)
    g2d = graph_emb.reshape(BLQ, D_MODEL)

    # single stacked activation operand (block-diag lane layout + ones columns)
    xin = jnp.zeros((XIN_R, XIN_C), jnp.float32)
    xin = xin.at[ROW_Q:ROW_Q + BLQ, 0:D_MODEL].set(q_in)
    xin = xin.at[ROW_Q:ROW_Q + BLQ, COL_ONE_Q].set(1.0)
    xin = xin.at[ROW_K:ROW_K + BLK, D_MODEL:2 * D_MODEL].set(k_in)
    xin = xin.at[ROW_K:ROW_K + BLK, COL_ONE_K].set(1.0)
    xin = xin.at[ROW_V:ROW_V + BLK, 2 * D_MODEL:3 * D_MODEL].set(img2d)
    xin = xin.at[ROW_V:ROW_V + BLK, COL_ONE_V].set(1.0)
    xin = xin.at[ROW_G:ROW_G + BLQ, 0:D_MODEL].set(g2d)

    # dense additive attention bias: key-padding mask + cross-batch block mask
    rb = jnp.arange(BLQ, dtype=jnp.int32)[:, None] // LQ
    cb = jnp.arange(BLK, dtype=jnp.int32)[None, :] // LK
    pad = patch_mask.reshape(1, BLK)
    bias = jnp.where((rb == cb) & jnp.logical_not(pad), 0.0, NEG_INF).astype(jnp.float32)

    # Single invocation, no grid: 3 input DMA streams (activations, bias, slab).
    out = pl.pallas_call(
        decoder_layer_kernel,
        out_shape=jax.ShapeDtypeStruct((BLQ, D_MODEL), jnp.float32),
        scratch_shapes=[pltpu.VMEM((BLQ, D_MODEL), jnp.float32)],
    )(xin, bias, slab)
    return out.reshape(B, LQ, D_MODEL)


def reference(graph_emb, graph_pos, image_emb, patch_pos, patch_mask, p):
    """Pure-JAX reference of the same forward pass (eval-mode dropout)."""
    q_in = graph_emb + graph_pos
    k_in = image_emb + patch_pos
    q = q_in @ p["wq"] + p["bq"]
    k = k_in @ p["wk"] + p["bk"]
    v = image_emb @ p["wv"] + p["bv"]
    qh = q.reshape(B, LQ, NHEAD, HEAD_DIM).transpose(0, 2, 1, 3)
    kh = k.reshape(B, LK, NHEAD, HEAD_DIM).transpose(0, 2, 1, 3)
    vh = v.reshape(B, LK, NHEAD, HEAD_DIM).transpose(0, 2, 1, 3)
    s = jnp.einsum("bhqd,bhkd->bhqk", qh * SCALE, kh)
    s = s + jnp.where(patch_mask, NEG_INF, 0.0)[:, None, None, :]
    pr = jax.nn.softmax(s, axis=-1)
    o = jnp.einsum("bhqk,bhkd->bhqd", pr, vh)
    o = o.transpose(0, 2, 1, 3).reshape(B, LQ, D_MODEL)
    attn_out = o @ p["wo"] + p["bo"]

    def ln(x, g, b):
        mu = jnp.mean(x, axis=-1, keepdims=True)
        var = jnp.mean((x - mu) ** 2, axis=-1, keepdims=True)
        return (x - mu) * jax.lax.rsqrt(var + EPS) * g + b

    tgt = ln(graph_emb + attn_out, p["g1"], p["be1"])
    ff = jnp.maximum(tgt @ p["w1"] + p["b1"], 0.0) @ p["w2"] + p["b2"]
    return ln(tgt + ff, p["g2"], p["be2"])


if __name__ == "__main__":
    key = jax.random.PRNGKey(0)
    ks = jax.random.split(key, 16)

    graph_emb = jax.random.normal(ks[0], (B, LQ, D_MODEL), jnp.float32)
    graph_pos = jax.random.normal(ks[1], (B, LQ, D_MODEL), jnp.float32) * 0.1
    image_emb = jax.random.normal(ks[2], (B, LK, D_MODEL), jnp.float32)
    patch_pos = jax.random.normal(ks[3], (B, LK, D_MODEL), jnp.float32) * 0.1
    # key_padding_mask: True = ignore that key position (last 4 patches padded)
    patch_mask = jnp.zeros((B, LK), dtype=bool).at[:, LK - 4:].set(True)

    def w(k, shape, scale=0.1):
        return jax.random.normal(k, shape, jnp.float32) * scale

    params = {
        "wq": w(ks[4], (D_MODEL, D_MODEL)), "bq": w(ks[5], (1, D_MODEL), 0.02),
        "wk": w(ks[6], (D_MODEL, D_MODEL)), "bk": w(ks[7], (1, D_MODEL), 0.02),
        "wv": w(ks[8], (D_MODEL, D_MODEL)), "bv": w(ks[9], (1, D_MODEL), 0.02),
        "wo": w(ks[10], (D_MODEL, D_MODEL)), "bo": w(ks[11], (1, D_MODEL), 0.02),
        "g1": jnp.ones((1, D_MODEL), jnp.float32),
        "be1": jnp.zeros((1, D_MODEL), jnp.float32),
        "w1": w(ks[12], (D_MODEL, DIM_FF)), "b1": w(ks[13], (1, DIM_FF), 0.02),
        "w2": w(ks[14], (DIM_FF, D_MODEL)), "b2": w(ks[15], (1, D_MODEL), 0.02),
        "g2": jnp.ones((1, D_MODEL), jnp.float32),
        "be2": jnp.zeros((1, D_MODEL), jnp.float32),
    }

    slab = jax.block_until_ready(pack_params(params))   # one-time param packing

    out = transformer_decoder_layer(graph_emb, graph_pos, image_emb,
                                    patch_pos, patch_mask, slab)
    out = jax.block_until_ready(out)

    ref = reference(graph_emb, graph_pos, image_emb, patch_pos, patch_mask, params)
    np.testing.assert_allclose(np.asarray(out), np.asarray(ref),
                               rtol=1e-3, atol=1e-3)
    print("KERNEL_OK")
</pallas_src>

<mosaic_0001>
module attributes {stable_mosaic.version = 11 : i64} {
  func.func @decoder_layer_kernel(%arg0: memref<96x128xf32, #tpu.memory_space<vmem>>, %arg1: memref<16x32xf32, #tpu.memory_space<vmem>>, %arg2: memref<368x64xf32, #tpu.memory_space<vmem>>, %arg3: memref<16x32xf32, #tpu.memory_space<vmem>>, %arg4: memref<16x32xf32, #tpu.memory_space<vmem>>) attributes {dimension_semantics = [], scalar_prefetch = 0 : i64, scratch_operands = 1 : i64, tpu.core_type = #tpu.core_type<tc>} {
    %c0 = arith.constant 0 : index
    %c0_0 = arith.constant 0 : index
    %0 = vector.load %arg0[%c0, %c0_0] : memref<96x128xf32, #tpu.memory_space<vmem>>, vector<80x128xf32>
    %c0_1 = arith.constant 0 : index
    %c0_2 = arith.constant 0 : index
    %1 = vector.load %arg2[%c0_1, %c0_2] : memref<368x64xf32, #tpu.memory_space<vmem>>, vector<128x32xf32>
    %cst = arith.constant dense<0.000000e+00> : vector<80x32xf32>
    %2 = tpu.matmul %0, %1, %cst {dimension_numbers = #tpu.dot_dimension_numbers<[1], [0], [0], [1], [0, 0, 1, 1], [], []>} : vector<80x128xf32>, vector<128x32xf32>, vector<80x32xf32> -> vector<80x32xf32>
    %3 = vector.extract_strided_slice %2 {offsets = [0, 0], sizes = [16, 32], strides = [1, 1]} : vector<80x32xf32> to vector<16x32xf32>
    %4 = vector.extract_strided_slice %2 {offsets = [16, 0], sizes = [32, 32], strides = [1, 1]} : vector<80x32xf32> to vector<32x32xf32>
    %5 = vector.extract_strided_slice %2 {offsets = [48, 0], sizes = [32, 32], strides = [1, 1]} : vector<80x32xf32> to vector<32x32xf32>
    %6 = tpu.transpose %4, [1, 0] : vector<32x32xf32> -> vector<32x32xf32>
    %c0_3 = arith.constant 0 : index
    %c0_4 = arith.constant 0 : index
    %7 = vector.load %arg1[%c0_3, %c0_4] : memref<16x32xf32, #tpu.memory_space<vmem>>, vector<16x32xf32>
    %8 = vector.extract_strided_slice %3 {offsets = [0, 0], sizes = [16, 8], strides = [1, 1]} : vector<16x32xf32> to vector<16x8xf32>
    %9 = vector.extract_strided_slice %6 {offsets = [0, 0], sizes = [8, 32], strides = [1, 1]} : vector<32x32xf32> to vector<8x32xf32>
    %cst_5 = arith.constant dense<0.000000e+00> : vector<16x32xf32>
    %10 = tpu.matmul %8, %9, %cst_5 {dimension_numbers = #tpu.dot_dimension_numbers<[1], [0], [0], [1], [0, 0, 1, 1], [], []>} : vector<16x8xf32>, vector<8x32xf32>, vector<16x32xf32> -> vector<16x32xf32>
    %11 = arith.addf %10, %7 : vector<16x32xf32>
    %cst_6 = arith.constant dense<0xFF800000> : vector<16xf32>
    %12 = vector.multi_reduction <maximumf>, %11, %cst_6 [1] : vector<16x32xf32> to vector<16xf32>
    %13 = vector.shape_cast %12 : vector<16xf32> to vector<16x1xf32>
    %14 = vector.broadcast %13 : vector<16x1xf32> to vector<16x32xf32>
    %15 = arith.subf %11, %14 : vector<16x32xf32>
    %16 = math.exp %15 : vector<16x32xf32>
    %cst_7 = arith.constant dense<0.000000e+00> : vector<16xf32>
    %17 = vector.multi_reduction <add>, %16, %cst_7 [1] : vector<16x32xf32> to vector<16xf32>
    %18 = vector.shape_cast %17 : vector<16xf32> to vector<16x1xf32>
    %19 = tpu.reciprocal %18 {approx = true} : vector<16x1xf32> -> vector<16x1xf32>
    %20 = vector.broadcast %19 : vector<16x1xf32> to vector<16x32xf32>
    %21 = arith.mulf %16, %20 : vector<16x32xf32>
    %22 = vector.extract_strided_slice %5 {offsets = [0, 0], sizes = [32, 8], strides = [1, 1]} : vector<32x32xf32> to vector<32x8xf32>
    %cst_8 = arith.constant dense<0.000000e+00> : vector<16x8xf32>
    %23 = tpu.matmul %21, %22, %cst_8 {dimension_numbers = #tpu.dot_dimension_numbers<[1], [0], [0], [1], [0, 0, 1, 1], [], []>} : vector<16x32xf32>, vector<32x8xf32>, vector<16x8xf32> -> vector<16x8xf32>
    %c0_9 = arith.constant 0 : index
    %c0_10 = arith.constant 0 : index
    %24 = vector.load %arg4[%c0_9, %c0_10] : memref<16x32xf32, #tpu.memory_space<vmem>>, vector<16x8xf32>
    tpu.vector_store %arg4[%c0_9, %c0_10], %23 {strides = array<i32>} : memref<16x32xf32, #tpu.memory_space<vmem>>, vector<16x8xf32>,
    %25 = vector.extract_strided_slice %3 {offsets = [0, 8], sizes = [16, 8], strides = [1, 1]} : vector<16x32xf32> to vector<16x8xf32>
    %26 = vector.extract_strided_slice %6 {offsets = [8, 0], sizes = [8, 32], strides = [1, 1]} : vector<32x32xf32> to vector<8x32xf32>
    %cst_11 = arith.constant dense<0.000000e+00> : vector<16x32xf32>
    %27 = tpu.matmul %25, %26, %cst_11 {dimension_numbers = #tpu.dot_dimension_numbers<[1], [0], [0], [1], [0, 0, 1, 1], [], []>} : vector<16x8xf32>, vector<8x32xf32>, vector<16x32xf32> -> vector<16x32xf32>
    %28 = arith.addf %27, %7 : vector<16x32xf32>
    %cst_12 = arith.constant dense<0xFF800000> : vector<16xf32>
    %29 = vector.multi_reduction <maximumf>, %28, %cst_12 [1] : vector<16x32xf32> to vector<16xf32>
    %30 = vector.shape_cast %29 : vector<16xf32> to vector<16x1xf32>
    %31 = vector.broadcast %30 : vector<16x1xf32> to vector<16x32xf32>
    %32 = arith.subf %28, %31 : vector<16x32xf32>
    %33 = math.exp %32 : vector<16x32xf32>
    %cst_13 = arith.constant dense<0.000000e+00> : vector<16xf32>
    %34 = vector.multi_reduction <add>, %33, %cst_13 [1] : vector<16x32xf32> to vector<16xf32>
    %35 = vector.shape_cast %34 : vector<16xf32> to vector<16x1xf32>
    %36 = tpu.reciprocal %35 {approx = true} : vector<16x1xf32> -> vector<16x1xf32>
    %37 = vector.broadcast %36 : vector<16x1xf32> to vector<16x32xf32>
    %38 = arith.mulf %33, %37 : vector<16x32xf32>
    %39 = vector.extract_strided_slice %5 {offsets = [0, 8], sizes = [32, 8], strides = [1, 1]} : vector<32x32xf32> to vector<32x8xf32>
    %cst_14 = arith.constant dense<0.000000e+00> : vector<16x8xf32>
    %40 = tpu.matmul %38, %39, %cst_14 {dimension_numbers = #tpu.dot_dimension_numbers<[1], [0], [0], [1], [0, 0, 1, 1], [], []>} : vector<16x32xf32>, vector<32x8xf32>, vector<16x8xf32> -> vector<16x8xf32>
    %c0_15 = arith.constant 0 : index
    %c8 = arith.constant 8 : index
    %41 = vector.load %arg4[%c0_15, %c8] : memref<16x32xf32, #tpu.memory_space<vmem>>, vector<16x8xf32>
    tpu.vector_store %arg4[%c0_15, %c8], %40 {strides = array<i32>} : memref<16x32xf32, #tpu.memory_space<vmem>>, vector<16x8xf32>,
    %42 = vector.extract_strided_slice %3 {offsets = [0, 16], sizes = [16, 8], strides = [1, 1]} : vector<16x32xf32> to vector<16x8xf32>
    %43 = vector.extract_strided_slice %6 {offsets = [16, 0], sizes = [8, 32], strides = [1, 1]} : vector<32x32xf32> to vector<8x32xf32>
    %cst_16 = arith.constant dense<0.000000e+00> : vector<16x32xf32>
    %44 = tpu.matmul %42, %43, %cst_16 {dimension_numbers = #tpu.dot_dimension_numbers<[1], [0], [0], [1], [0, 0, 1, 1], [], []>} : vector<16x8xf32>, vector<8x32xf32>, vector<16x32xf32> -> vector<16x32xf32>
    %45 = arith.addf %44, %7 : vector<16x32xf32>
    %cst_17 = arith.constant dense<0xFF800000> : vector<16xf32>
    %46 = vector.multi_reduction <maximumf>, %45, %cst_17 [1] : vector<16x32xf32> to vector<16xf32>
    %47 = vector.shape_cast %46 : vector<16xf32> to vector<16x1xf32>
    %48 = vector.broadcast %47 : vector<16x1xf32> to vector<16x32xf32>
    %49 = arith.subf %45, %48 : vector<16x32xf32>
    %50 = math.exp %49 : vector<16x32xf32>
    %cst_18 = arith.constant dense<0.000000e+00> : vector<16xf32>
    %51 = vector.multi_reduction <add>, %50, %cst_18 [1] : vector<16x32xf32> to vector<16xf32>
    %52 = vector.shape_cast %51 : vector<16xf32> to vector<16x1xf32>
    %53 = tpu.reciprocal %52 {approx = true} : vector<16x1xf32> -> vector<16x1xf32>
    %54 = vector.broadcast %53 : vector<16x1xf32> to vector<16x32xf32>
    %55 = arith.mulf %50, %54 : vector<16x32xf32>
    %56 = vector.extract_strided_slice %5 {offsets = [0, 16], sizes = [32, 8], strides = [1, 1]} : vector<32x32xf32> to vector<32x8xf32>
    %cst_19 = arith.constant dense<0.000000e+00> : vector<16x8xf32>
    %57 = tpu.matmul %55, %56, %cst_19 {dimension_numbers = #tpu.dot_dimension_numbers<[1], [0], [0], [1], [0, 0, 1, 1], [], []>} : vector<16x32xf32>, vector<32x8xf32>, vector<16x8xf32> -> vector<16x8xf32>
    %c0_20 = arith.constant 0 : index
    %c16 = arith.constant 16 : index
    %58 = vector.load %arg4[%c0_20, %c16] : memref<16x32xf32, #tpu.memory_space<vmem>>, vector<16x8xf32>
    tpu.vector_store %arg4[%c0_20, %c16], %57 {strides = array<i32>} : memref<16x32xf32, #tpu.memory_space<vmem>>, vector<16x8xf32>,
    %59 = vector.extract_strided_slice %3 {offsets = [0, 24], sizes = [16, 8], strides = [1, 1]} : vector<16x32xf32> to vector<16x8xf32>
    %60 = vector.extract_strided_slice %6 {offsets = [24, 0], sizes = [8, 32], strides = [1, 1]} : vector<32x32xf32> to vector<8x32xf32>
    %cst_21 = arith.constant dense<0.000000e+00> : vector<16x32xf32>
    %61 = tpu.matmul %59, %60, %cst_21 {dimension_numbers = #tpu.dot_dimension_numbers<[1], [0], [0], [1], [0, 0, 1, 1], [], []>} : vector<16x8xf32>, vector<8x32xf32>, vector<16x32xf32> -> vector<16x32xf32>
    %62 = arith.addf %61, %7 : vector<16x32xf32>
    %cst_22 = arith.constant dense<0xFF800000> : vector<16xf32>
    %63 = vector.multi_reduction <maximumf>, %62, %cst_22 [1] : vector<16x32xf32> to vector<16xf32>
    %64 = vector.shape_cast %63 : vector<16xf32> to vector<16x1xf32>
    %65 = vector.broadcast %64 : vector<16x1xf32> to vector<16x32xf32>
    %66 = arith.subf %62, %65 : vector<16x32xf32>
    %67 = math.exp %66 : vector<16x32xf32>
    %cst_23 = arith.constant dense<0.000000e+00> : vector<16xf32>
    %68 = vector.multi_reduction <add>, %67, %cst_23 [1] : vector<16x32xf32> to vector<16xf32>
    %69 = vector.shape_cast %68 : vector<16xf32> to vector<16x1xf32>
    %70 = tpu.reciprocal %69 {approx = true} : vector<16x1xf32> -> vector<16x1xf32>
    %71 = vector.broadcast %70 : vector<16x1xf32> to vector<16x32xf32>
    %72 = arith.mulf %67, %71 : vector<16x32xf32>
    %73 = vector.extract_strided_slice %5 {offsets = [0, 24], sizes = [32, 8], strides = [1, 1]} : vector<32x32xf32> to vector<32x8xf32>
    %cst_24 = arith.constant dense<0.000000e+00> : vector<16x8xf32>
    %74 = tpu.matmul %72, %73, %cst_24 {dimension_numbers = #tpu.dot_dimension_numbers<[1], [0], [0], [1], [0, 0, 1, 1], [], []>} : vector<16x32xf32>, vector<32x8xf32>, vector<16x8xf32> -> vector<16x8xf32>
    %c0_25 = arith.constant 0 : index
    %c24 = arith.constant 24 : index
    %75 = vector.load %arg4[%c0_25, %c24] : memref<16x32xf32, #tpu.memory_space<vmem>>, vector<16x8xf32>
    tpu.vector_store %arg4[%c0_25, %c24], %74 {strides = array<i32>} : memref<16x32xf32, #tpu.memory_space<vmem>>, vector<16x8xf32>,
    %c0_26 = arith.constant 0 : index
    %c0_27 = arith.constant 0 : index
    %76 = vector.load %arg4[%c0_26, %c0_27] : memref<16x32xf32, #tpu.memory_space<vmem>>, vector<16x32xf32>
    %c128 = arith.constant 128 : index
    %c0_28 = arith.constant 0 : index
    %77 = vector.load %arg2[%c128, %c0_28] : memref<368x64xf32, #tpu.memory_space<vmem>>, vector<32x32xf32>
    %cst_29 = arith.constant dense<0.000000e+00> : vector<16x32xf32>
    %78 = tpu.matmul %76, %77, %cst_29 {dimension_numbers = #tpu.dot_dimension_numbers<[1], [0], [0], [1], [0, 0, 1, 1], [], []>} : vector<16x32xf32>, vector<32x32xf32>, vector<16x32xf32> -> vector<16x32xf32>
    %c256 = arith.constant 256 : index
    %c0_30 = arith.constant 0 : index
    %79 = vector.load %arg2[%c256, %c0_30] : memref<368x64xf32, #tpu.memory_space<vmem>>, vector<16x32xf32>
    %80 = arith.addf %78, %79 : vector<16x32xf32>
    %c80 = arith.constant 80 : index
    %c0_31 = arith.constant 0 : index
    %81 = vector.load %arg0[%c80, %c0_31] : memref<96x128xf32, #tpu.memory_space<vmem>>, vector<16x32xf32>
    %82 = arith.addf %81, %80 : vector<16x32xf32>
    %cst_32 = arith.constant dense<0.000000e+00> : vector<16xf32>
    %83 = vector.multi_reduction <add>, %82, %cst_32 [1] : vector<16x32xf32> to vector<16xf32>
    %84 = vector.shape_cast %83 : vector<16xf32> to vector<16x1xf32>
    %cst_33 = arith.constant 3.200000e+01 : f32
    %85 = vector.broadcast %cst_33 : f32 to vector<16x1xf32>
    %86 = arith.divf %84, %85 : vector<16x1xf32>
    %87 = vector.broadcast %86 : vector<16x1xf32> to vector<16x32xf32>
    %88 = arith.subf %82, %87 : vector<16x32xf32>
    %89 = arith.mulf %88, %88 : vector<16x32xf32>
    %cst_34 = arith.constant dense<0.000000e+00> : vector<16xf32>
    %90 = vector.multi_reduction <add>, %89, %cst_34 [1] : vector<16x32xf32> to vector<16xf32>
    %91 = vector.shape_cast %90 : vector<16xf32> to vector<16x1xf32>
    %cst_35 = arith.constant 3.200000e+01 : f32
    %92 = vector.broadcast %cst_35 : f32 to vector<16x1xf32>
    %93 = arith.divf %91, %92 : vector<16x1xf32>
    %94 = vector.broadcast %86 : vector<16x1xf32> to vector<16x32xf32>
    %95 = arith.subf %82, %94 : vector<16x32xf32>
    %cst_36 = arith.constant 9.99999974E-6 : f32
    %96 = vector.broadcast %cst_36 : f32 to vector<16x1xf32>
    %97 = arith.addf %93, %96 : vector<16x1xf32>
    %98 = math.rsqrt %97 : vector<16x1xf32>
    %99 = vector.broadcast %98 : vector<16x1xf32> to vector<16x32xf32>
    %100 = arith.mulf %95, %99 : vector<16x32xf32>
    %c304 = arith.constant 304 : index
    %c0_37 = arith.constant 0 : index
    %101 = vector.load %arg2[%c304, %c0_37] : memref<368x64xf32, #tpu.memory_space<vmem>>, vector<16x32xf32>
    %102 = arith.mulf %100, %101 : vector<16x32xf32>
    %c320 = arith.constant 320 : index
    %c0_38 = arith.constant 0 : index
    %103 = vector.load %arg2[%c320, %c0_38] : memref<368x64xf32, #tpu.memory_space<vmem>>, vector<16x32xf32>
    %104 = arith.addf %102, %103 : vector<16x32xf32>
    %c160 = arith.constant 160 : index
    %c0_39 = arith.constant 0 : index
    %105 = vector.load %arg2[%c160, %c0_39] : memref<368x64xf32, #tpu.memory_space<vmem>>, vector<32x64xf32>
    %cst_40 = arith.constant dense<0.000000e+00> : vector<16x64xf32>
    %106 = tpu.matmul %104, %105, %cst_40 {dimension_numbers = #tpu.dot_dimension_numbers<[1], [0], [0], [1], [0, 0, 1, 1], [], []>} : vector<16x32xf32>, vector<32x64xf32>, vector<16x64xf32> -> vector<16x64xf32>
    %c272 = arith.constant 272 : index
    %c0_41 = arith.constant 0 : index
    %107 = vector.load %arg2[%c272, %c0_41] : memref<368x64xf32, #tpu.memory_space<vmem>>, vector<16x64xf32>
    %108 = arith.addf %106, %107 : vector<16x64xf32>
    %cst_42 = arith.constant 0.000000e+00 : f32
    %109 = vector.broadcast %cst_42 : f32 to vector<16x64xf32>
    %110 = arith.maximumf %108, %109 : vector<16x64xf32>
    %c192 = arith.constant 192 : index
    %c0_43 = arith.constant 0 : index
    %111 = vector.load %arg2[%c192, %c0_43] : memref<368x64xf32, #tpu.memory_space<vmem>>, vector<64x32xf32>
    %cst_44 = arith.constant dense<0.000000e+00> : vector<16x32xf32>
    %112 = tpu.matmul %110, %111, %cst_44 {dimension_numbers = #tpu.dot_dimension_numbers<[1], [0], [0], [1], [0, 0, 1, 1], [], []>} : vector<16x64xf32>, vector<64x32xf32>, vector<16x32xf32> -> vector<16x32xf32>
    %c288 = arith.constant 288 : index
    %c0_45 = arith.constant 0 : index
    %113 = vector.load %arg2[%c288, %c0_45] : memref<368x64xf32, #tpu.memory_space<vmem>>, vector<16x32xf32>
    %114 = arith.addf %112, %113 : vector<16x32xf32>
    %115 = arith.addf %104, %114 : vector<16x32xf32>
    %cst_46 = arith.constant dense<0.000000e+00> : vector<16xf32>
    %116 = vector.multi_reduction <add>, %115, %cst_46 [1] : vector<16x32xf32> to vector<16xf32>
    %117 = vector.shape_cast %116 : vector<16xf32> to vector<16x1xf32>
    %cst_47 = arith.constant 3.200000e+01 : f32
    %118 = vector.broadcast %cst_47 : f32 to vector<16x1xf32>
    %119 = arith.divf %117, %118 : vector<16x1xf32>
    %120 = vector.broadcast %119 : vector<16x1xf32> to vector<16x32xf32>
    %121 = arith.subf %115, %120 : vector<16x32xf32>
    %122 = arith.mulf %121, %121 : vector<16x32xf32>
    %cst_48 = arith.constant dense<0.000000e+00> : vector<16xf32>
    %123 = vector.multi_reduction <add>, %122, %cst_48 [1] : vector<16x32xf32> to vector<16xf32>
    %124 = vector.shape_cast %123 : vector<16xf32> to vector<16x1xf32>
    %cst_49 = arith.constant 3.200000e+01 : f32
    %125 = vector.broadcast %cst_49 : f32 to vector<16x1xf32>
    %126 = arith.divf %124, %125 : vector<16x1xf32>
    %127 = vector.broadcast %119 : vector<16x1xf32> to vector<16x32xf32>
    %128 = arith.subf %115, %127 : vector<16x32xf32>
    %cst_50 = arith.constant 9.99999974E-6 : f32
    %129 = vector.broadcast %cst_50 : f32 to vector<16x1xf32>
    %130 = arith.addf %126, %129 : vector<16x1xf32>
    %131 = math.rsqrt %130 : vector<16x1xf32>
    %132 = vector.broadcast %131 : vector<16x1xf32> to vector<16x32xf32>
    %133 = arith.mulf %128, %132 : vector<16x32xf32>
    %c336 = arith.constant 336 : index
    %c0_51 = arith.constant 0 : index
    %134 = vector.load %arg2[%c336, %c0_51] : memref<368x64xf32, #tpu.memory_space<vmem>>, vector<16x32xf32>
    %135 = arith.mulf %133, %134 : vector<16x32xf32>
    %c352 = arith.constant 352 : index
    %c0_52 = arith.constant 0 : index
    %136 = vector.load %arg2[%c352, %c0_52] : memref<368x64xf32, #tpu.memory_space<vmem>>, vector<16x32xf32>
    %137 = arith.addf %135, %136 : vector<16x32xf32>
    %c0_53 = arith.constant 0 : index
    %c0_54 = arith.constant 0 : index
    %138 = vector.load %arg3[%c0_53, %c0_54] : memref<16x32xf32, #tpu.memory_space<vmem>>, vector<16x32xf32>
    tpu.vector_store %arg3[%c0_53, %c0_54], %137 {strides = array<i32>} : memref<16x32xf32, #tpu.memory_space<vmem>>, vector<16x32xf32>,
    return
  }
}

</mosaic_0001>

<llo_original>
// kernel: transformer_decoder_layer.1
$region0: #{transformer_decoder_layer.1}
  #allocation0 [shape = 'u32[]', space=smem, size = 0x4, offset = 0x4, fixed_abs, tag = 'smem constant byte address 0x4 - core index']
  #allocation1 [shape = 'u32[72,128]{1,0:T(1,128)}', space=vmem, size = 0x9000, scoped, tag = 'internal scratch']
  #allocation2 [shape = 'f32[16,32]{1,0:T(8,128)}', space=vmem, size = 0x2000, scoped, tag = 'scratch operand']
  %s0 = inlined_call_operand.vmem [shape: f32[96,128], index: 0, kind: input, shape index: {}]
  %s1 = inlined_call_operand.vmem [shape: f32[16,32], index: 1, kind: input, shape index: {}]
  %s2 = inlined_call_operand.vmem [shape: f32[368,64], index: 2, kind: input, shape index: {}]
  %s3 = inlined_call_operand.hbm [shape: f32[16,32], index: 3, kind: output, shape index: {}]
  %s4 = sld [smem:[#allocation0]]
  $region22: #{transformer_decoder_layer.1} parent=0
    _
  %s6 = ssub.s32 1, %s4
  %s7 = scalar_select 0, %s6, %s4
  $region1: #{transformer_decoder_layer.1} parent=0
    #allocation3 [shape = 'u8[8192]{0}', space=vmem, size = 0x2000, scoped, tag = 'output window, operand 0, single buffered']
    #allocation4 [shape = 's32[1]{0}', space=sflag, size = 0x4, scoped, tag = 'scoped memory for transformer_decoder_layer.1']
    %8 = vsyncpa [#allocation4], 0
    // Predicated region
    $region2: #{transformer_decoder_layer.1} parent=1 // pred_check
      _
    $region3: #{transformer_decoder_layer.1} parent=1 // pred_check_branch
      %10 = sbr.rel (0) target = $region5
    $region4: #{transformer_decoder_layer.1} parent=1 // pred_region
      _
    $region5: #{transformer_decoder_layer.1} parent=1 // pred_fallthru
      _
    // Predicated region
    $region6: #{transformer_decoder_layer.1} parent=1 // pred_check
      _
    $region7: #{transformer_decoder_layer.1} parent=1 // pred_check_branch
      %12 = sbr.rel (0) target = $region9
    $region8: #{transformer_decoder_layer.1} parent=1 // pred_region
      _
    $region9: #{transformer_decoder_layer.1} parent=1 // pred_fallthru
      _
    // Predicated region
    $region10: #{transformer_decoder_layer.1} parent=1 // pred_check
      _
    $region11: #{transformer_decoder_layer.1} parent=1 // pred_check_branch
      %14 = sbr.rel (0) target = $region13
    $region12: #{transformer_decoder_layer.1} parent=1 // pred_region
      _
    $region13: #{transformer_decoder_layer.1} parent=1 // pred_fallthru
      _
    %v15 = vld [vmem:[%s0] sm:$0xff]
    %v16 = vld [vmem:[%s0 + $0x8] sm:$0xff]
    %v17 = vld [vmem:[%s0 + $0x10] sm:$0xff]
    %v18 = vld [vmem:[%s0 + $0x18] sm:$0xff]
    %v19 = vld [vmem:[%s0 + $0x20] sm:$0xff]
    %v20 = vld [vmem:[%s0 + $0x28] sm:$0xff]
    %v21 = vld [vmem:[%s0 + $0x30] sm:$0xff]
    %v22 = vld [vmem:[%s0 + $0x38] sm:$0xff]
    %v23 = vld [vmem:[%s0 + $0x40] sm:$0xff]
    %v24 = vld [vmem:[%s0 + $0x48] sm:$0xff]
    %v25 = vld [vmem:[%s2] sm:$0xff]
    %v26 = vld [vmem:[%s2 + $0x8] sm:$0xff]
    %v27 = vld [vmem:[%s2 + $0x10] sm:$0xff]
    %v28 = vld [vmem:[%s2 + $0x18] sm:$0xff]
    %v29 = vld [vmem:[%s2 + $0x20] sm:$0xff]
    %v30 = vld [vmem:[%s2 + $0x28] sm:$0xff]
    %v31 = vld [vmem:[%s2 + $0x30] sm:$0xff]
    %v32 = vld [vmem:[%s2 + $0x38] sm:$0xff]
    %v33 = vld [vmem:[%s2 + $0x40] sm:$0xff]
    %v34 = vld [vmem:[%s2 + $0x48] sm:$0xff]
    %v35 = vld [vmem:[%s2 + $0x50] sm:$0xff]
    %v36 = vld [vmem:[%s2 + $0x58] sm:$0xff]
    %v37 = vld [vmem:[%s2 + $0x60] sm:$0xff]
    %v38 = vld [vmem:[%s2 + $0x68] sm:$0xff]
    %v39 = vld [vmem:[%s2 + $0x70] sm:$0xff]
    %v40 = vld [vmem:[%s2 + $0x78] sm:$0xff]
    %41 = vmatpush.msra.mxu0 %v40
    %42 = vmatpush.msra.mxu0 %v39
    %43 = vmatpush.msra.mxu0 %v38
    %44 = vmatpush.msra.mxu0 %v37
    %45 = vmatpush.msra.mxu0 %v36
    %46 = vmatpush.msra.mxu0 %v35
    %47 = vmatpush.msra.mxu0 %v34
    %48 = vmatpush.msra.mxu0 %v33
    %49 = vmatpush.msra.mxu0 %v32
    %50 = vmatpush.msra.mxu0 %v31
    %51 = vmatpush.msra.mxu0 %v30
    %52 = vmatpush.msra.mxu0 %v29
    %53 = vmatpush.msra.mxu0 %v28
    %54 = vmatpush.msra.mxu0 %v27
    %55 = vmatpush.msra.mxu0 %v26
    %56 = vmatpush.msra.mxu0 %v25
    %57 = vmatmul.f32.gmra.mxu0 %v15
    %v58 = vpop.f32.mrf.mxu0
    %v59 = vadd.f32 0.0, %v58
    %60 = vmatmul.f32.gmra.mxu0 %v16
    %v61 = vpop.f32.mrf.mxu0
    %v62 = vadd.f32 0.0, %v61
    %63 = vmatmul.f32.gmra.mxu0 %v17
    %v64 = vpop.f32.mrf.mxu0
    %v65 = vadd.f32 0.0, %v64
    %66 = vmatmul.f32.gmra.mxu0 %v18
    %v67 = vpop.f32.mrf.mxu0
    %v68 = vadd.f32 0.0, %v67
    %69 = vmatmul.f32.gmra.mxu0 %v19
    %v70 = vpop.f32.mrf.mxu0
    %v71 = vadd.f32 0.0, %v70
    %72 = vmatmul.f32.gmra.mxu0 %v20
    %v73 = vpop.f32.mrf.mxu0
    %v74 = vadd.f32 0.0, %v73
    %75 = vmatmul.f32.gmra.mxu0 %v21
    %v76 = vpop.f32.mrf.mxu0
    %v77 = vadd.f32 0.0, %v76
    %78 = vmatmul.f32.gmra.mxu0 %v22
    %v79 = vpop.f32.mrf.mxu0
    %v80 = vadd.f32 0.0, %v79
    %81 = vmatmul.f32.gmra.mxu0 %v23
    %v82 = vpop.f32.mrf.mxu0
    %v83 = vadd.f32 0.0, %v82
    %84 = vmatmul.f32.gmra.mxu0 %v24
    %v85 = vpop.f32.mrf.mxu0
    %v86 = vadd.f32 0.0, %v85
    %87 = vdwg.mxu0
    %v88 = vld [vmem:[%s1] sm:$0xff]
    %v89 = vld [vmem:[%s1 + $0x8] sm:$0xff]
    %vm90 = vcmask 64512
    %v92 = vsel %vm90, %v59, 0
    %v95 = vsel %vm90, %v62, 0
    %v98 = vsel %vm90, %v65, 0
    %v101 = vsel %vm90, %v68, 0
    %v104 = vsel %vm90, %v71, 0
    %v107 = vsel %vm90, %v74, 0
    %109 = vmatpush.xpose.msra.mxu0 0.0
    %110 = vmatpush.xpose.msra.mxu0 0.0
    %111 = vmatpush.xpose.msra.mxu0 0.0
    %112 = vmatpush.xpose.msra.mxu0 0.0
    %113 = vmatpush.xpose.msra.mxu0 0.0
    %114 = vmatpush.xpose.msra.mxu0 0.0
    %115 = vmatpush.xpose.msra.mxu0 0.0
    %116 = vmatpush.xpose.msra.mxu0 0.0
    %117 = vmatpush.xpose.msra.mxu0 0.0
    %118 = vmatpush.xpose.msra.mxu0 0.0
    %119 = vmatpush.xpose.msra.mxu0 0.0
    %120 = vmatpush.xpose.msra.mxu0 0.0
    %121 = vmatpush.xpose.msra.mxu0 %v107
    %122 = vmatpush.xpose.msra.mxu0 %v104
    %123 = vmatpush.xpose.msra.mxu0 %v101
    %124 = vmatpush.xpose.msra.mxu0 %v98
    %125 = vmatmul.f32.gmra.mxu0 %v92
    %v126 = vpop.f32.mrf.mxu0
    %v127 = vadd.f32 %v88, %v126
    %128 = vmatmul.f32.gmra.mxu0 %v95
    %v129 = vpop.f32.mrf.mxu0
    %v130 = vadd.f32 %v89, %v129
    %131 = vdwg.mxu0
    %vm132 = vcmask 261120
    %v133 = vsel %vm132, %v127, -inf
    %134 = vmax.xlane.f32.xlu0 %v133
    %v135 = vpop.xlane.xlu0 %134
    %v136 = vsel %vm132, %v130, -inf
    %137 = vmax.xlane.f32.xlu0 %v136
    %v138 = vpop.xlane.xlu0 %137
    %v139 = vsub.f32 %v127, %v135
    %v140 = vsub.f32 %v130, %v138
    %v141 = vmul.f32 %v139, 1.442695
    %v142 = vpow.pop %v141
    %v143 = vmul.f32 %v140, 1.442695
    %v144 = vpow.pop %v143
    %v145 = vsel %vm132, %v142, 0.0
    %146 = vadd.xlane.f32.xlu0 %v145
    %v147 = vpop.xlane.xlu0 %146
    %v148 = vsel %vm132, %v144, 0.0
    %149 = vadd.xlane.f32.xlu0 %v148
    %v150 = vpop.xlane.xlu0 %149
    %v151 = vrcp.pop %v147
    %v152 = vrcp.pop %v150
    %v153 = vmul.f32 %v142, %v151
    %v154 = vmul.f32 %v144, %v152
    %v156 = vsel %vm132, %v153, 0
    %v159 = vsel %vm132, %v154, 0
    %161 = vmatpush.msra.mxu0 0.0
    %162 = vmatpush.msra.mxu0 0.0
    %163 = vmatpush.msra.mxu0 0.0
    %164 = vmatpush.msra.mxu0 0.0
    %165 = vmatpush.msra.mxu0 0.0
    %166 = vmatpush.msra.mxu0 0.0
    %167 = vmatpush.msra.mxu0 0.0
    %168 = vmatpush.msra.mxu0 0.0
    %169 = vmatpush.msra.mxu0 0.0
    %170 = vmatpush.msra.mxu0 0.0
    %171 = vmatpush.msra.mxu0 0.0
    %172 = vmatpush.msra.mxu0 0.0
    %173 = vmatpush.msra.mxu0 %v86
    %174 = vmatpush.msra.mxu0 %v83
    %175 = vmatpush.msra.mxu0 %v80
    %176 = vmatpush.msra.mxu0 %v77
    %177 = vmatmul.f32.gmra.mxu0 %v156
    %v178 = vpop.f32.mrf.mxu0
    %v179 = vadd.f32 0.0, %v178
    %180 = vmatmul.f32.gmra.mxu0 %v159
    %v181 = vpop.f32.mrf.mxu0
    %v182 = vadd.f32 0.0, %v181
    %183 = vdwg.mxu0
    %184 = vst.msk [vmem:[#allocation2] sm:$0xff] %vm90, %v179
    %185 = vst.msk [vmem:[#allocation2 + $0x8] sm:$0xff] %vm90, %v182
    %186 = vrot.lane.b32.xlu0 %v59, 120
    %v187 = vpop.permute.xlu0 %186
    %188 = vrot.lane.b32.xlu0 %v62, 120
    %v189 = vpop.permute.xlu0 %188
    %190 = vrot.lane.b32.xlu0 %v65, 120
    %v191 = vpop.permute.xlu0 %190
    %192 = vrot.lane.b32.xlu0 %v68, 120
    %v193 = vpop.permute.xlu0 %192
    %194 = vrot.lane.b32.xlu0 %v71, 120
    %v195 = vpop.permute.xlu0 %194
    %196 = vrot.lane.b32.xlu0 %v74, 120
    %v197 = vpop.permute.xlu0 %196
    %v198 = vsel %vm90, %v187, 0
    %v200 = vsel %vm90, %v189, 0
    %v202 = vsel %vm90, %v191, 0
    %v204 = vsel %vm90, %v193, 0
    %v206 = vsel %vm90, %v195, 0
    %v208 = vsel %vm90, %v197, 0
    %210 = vmatpush.xpose.msra.mxu0 0.0
    %211 = vmatpush.xpose.msra.mxu0 0.0
    %212 = vmatpush.xpose.msra.mxu0 0.0
    %213 = vmatpush.xpose.msra.mxu0 0.0
    %214 = vmatpush.xpose.msra.mxu0 0.0
    %215 = vmatpush.xpose.msra.mxu0 0.0
    %216 = vmatpush.xpose.msra.mxu0 0.0
    %217 = vmatpush.xpose.msra.mxu0 0.0
    %218 = vmatpush.xpose.msra.mxu0 0.0
    %219 = vmatpush.xpose.msra.mxu0 0.0
    %220 = vmatpush.xpose.msra.mxu0 0.0
    %221 = vmatpush.xpose.msra.mxu0 0.0
    %222 = vmatpush.xpose.msra.mxu0 %v208
    %223 = vmatpush.xpose.msra.mxu0 %v206
    %224 = vmatpush.xpose.msra.mxu0 %v204
    %225 = vmatpush.xpose.msra.mxu0 %v202
    %226 = vmatmul.f32.gmra.mxu0 %v198
    %v227 = vpop.f32.mrf.mxu0
    %v228 = vadd.f32 %v88, %v227
    %229 = vmatmul.f32.gmra.mxu0 %v200
    %v230 = vpop.f32.mrf.mxu0
    %v231 = vadd.f32 %v89, %v230
    %232 = vdwg.mxu0
    %v233 = vsel %vm132, %v228, -inf
    %234 = vmax.xlane.f32.xlu0 %v233
    %v235 = vpop.xlane.xlu0 %234
    %v236 = vsel %vm132, %v231, -inf
    %237 = vmax.xlane.f32.xlu0 %v236
    %v238 = vpop.xlane.xlu0 %237
    %v239 = vsub.f32 %v228, %v235
    %v240 = vsub.f32 %v231, %v238
    %v241 = vmul.f32 %v239, 1.442695
    %v242 = vpow.pop %v241
    %v243 = vmul.f32 %v240, 1.442695
    %v244 = vpow.pop %v243
    %v245 = vsel %vm132, %v242, 0.0
    %246 = vadd.xlane.f32.xlu0 %v245
    %v247 = vpop.xlane.xlu0 %246
    %v248 = vsel %vm132, %v244, 0.0
    %249 = vadd.xlane.f32.xlu0 %v248
    %v250 = vpop.xlane.xlu0 %249
    %v251 = vrcp.pop %v247
    %v252 = vrcp.pop %v250
    %v253 = vmul.f32 %v242, %v251
    %v254 = vmul.f32 %v244, %v252
    %259 = vrot.lane.b32.xlu0 %v77, 120
    %v260 = vpop.permute.xlu0 %259
    %261 = vrot.lane.b32.xlu0 %v80, 120
    %v262 = vpop.permute.xlu0 %261
    %263 = vrot.lane.b32.xlu0 %v83, 120
    %v264 = vpop.permute.xlu0 %263
    %265 = vrot.lane.b32.xlu0 %v86, 120
    %v266 = vpop.permute.xlu0 %265
    %v272 = vsel %vm132, %v253, 0
    %v275 = vsel %vm132, %v254, 0
    %277 = vmatpush.msra.mxu0 0.0
    %278 = vmatpush.msra.mxu0 0.0
    %279 = vmatpush.msra.mxu0 0.0
    %280 = vmatpush.msra.mxu0 0.0
    %281 = vmatpush.msra.mxu0 0.0
    %282 = vmatpush.msra.mxu0 0.0
    %283 = vmatpush.msra.mxu0 0.0
    %284 = vmatpush.msra.mxu0 0.0
    %285 = vmatpush.msra.mxu0 0.0
    %286 = vmatpush.msra.mxu0 0.0
    %287 = vmatpush.msra.mxu0 0.0
    %288 = vmatpush.msra.mxu0 0.0
    %289 = vmatpush.msra.mxu0 %v266
    %290 = vmatpush.msra.mxu0 %v264
    %291 = vmatpush.msra.mxu0 %v262
    %292 = vmatpush.msra.mxu0 %v260
    %293 = vmatmul.f32.gmra.mxu0 %v272
    %v294 = vpop.f32.mrf.mxu0
    %v295 = vadd.f32 0.0, %v294
    %296 = vmatmul.f32.gmra.mxu0 %v275
    %v297 = vpop.f32.mrf.mxu0
    %v298 = vadd.f32 0.0, %v297
    %299 = vdwg.mxu0
    %302 = vrot.lane.b32.xlu0 %v295, 8
    %v303 = vpop.permute.xlu0 %302
    %304 = vrot.lane.b32.xlu0 %v298, 8
    %v305 = vpop.permute.xlu0 %304
    %vm308 = vcmask 130112
    %309 = vst.msk [vmem:[#allocation2] sm:$0xff] %vm308, %v303
    %310 = vst.msk [vmem:[#allocation2 + $0x8] sm:$0xff] %vm308, %v305
    %311 = vrot.lane.b32.xlu0 %v59, 112
    %v312 = vpop.permute.xlu0 %311
    %313 = vrot.lane.b32.xlu0 %v62, 112
    %v314 = vpop.permute.xlu0 %313
    %315 = vrot.lane.b32.xlu0 %v65, 112
    %v316 = vpop.permute.xlu0 %315
    %317 = vrot.lane.b32.xlu0 %v68, 112
    %v318 = vpop.permute.xlu0 %317
    %319 = vrot.lane.b32.xlu0 %v71, 112
    %v320 = vpop.permute.xlu0 %319
    %321 = vrot.lane.b32.xlu0 %v74, 112
    %v322 = vpop.permute.xlu0 %321
    %v323 = vsel %vm90, %v312, 0
    %v325 = vsel %vm90, %v314, 0
    %v327 = vsel %vm90, %v316, 0
    %v329 = vsel %vm90, %v318, 0
    %v331 = vsel %vm90, %v320, 0
    %v333 = vsel %vm90, %v322, 0
    %335 = vmatpush.xpose.msra.mxu0 0.0
    %336 = vmatpush.xpose.msra.mxu0 0.0
    %337 = vmatpush.xpose.msra.mxu0 0.0
    %338 = vmatpush.xpose.msra.mxu0 0.0
    %339 = vmatpush.xpose.msra.mxu0 0.0
    %340 = vmatpush.xpose.msra.mxu0 0.0
    %341 = vmatpush.xpose.msra.mxu0 0.0
    %342 = vmatpush.xpose.msra.mxu0 0.0
    %343 = vmatpush.xpose.msra.mxu0 0.0
    %344 = vmatpush.xpose.msra.mxu0 0.0
    %345 = vmatpush.xpose.msra.mxu0 0.0
    %346 = vmatpush.xpose.msra.mxu0 0.0
    %347 = vmatpush.xpose.msra.mxu0 %v333
    %348 = vmatpush.xpose.msra.mxu0 %v331
    %349 = vmatpush.xpose.msra.mxu0 %v329
    %350 = vmatpush.xpose.msra.mxu0 %v327
    %351 = vmatmul.f32.gmra.mxu0 %v323
    %v352 = vpop.f32.mrf.mxu0
    %v353 = vadd.f32 %v88, %v352
    %354 = vmatmul.f32.gmra.mxu0 %v325
    %v355 = vpop.f32.mrf.mxu0
    %v356 = vadd.f32 %v89, %v355
    %357 = vdwg.mxu0
    %v358 = vsel %vm132, %v353, -inf
    %359 = vmax.xlane.f32.xlu0 %v358
    %v360 = vpop.xlane.xlu0 %359
    %v361 = vsel %vm132, %v356, -inf
    %362 = vmax.xlane.f32.xlu0 %v361
    %v363 = vpop.xlane.xlu0 %362
    %v364 = vsub.f32 %v353, %v360
    %v365 = vsub.f32 %v356, %v363
    %v366 = vmul.f32 %v364, 1.442695
    %v367 = vpow.pop %v366
    %v368 = vmul.f32 %v365, 1.442695
    %v369 = vpow.pop %v368
    %v370 = vsel %vm132, %v367, 0.0
    %371 = vadd.xlane.f32.xlu0 %v370
    %v372 = vpop.xlane.xlu0 %371
    %v373 = vsel %vm132, %v369, 0.0
    %374 = vadd.xlane.f32.xlu0 %v373
    %v375 = vpop.xlane.xlu0 %374
    %v376 = vrcp.pop %v372
    %v377 = vrcp.pop %v375
    %v378 = vmul.f32 %v367, %v376
    %v379 = vmul.f32 %v369, %v377
    %380 = vrot.lane.b32.xlu0 %v77, 112
    %v381 = vpop.permute.xlu0 %380
    %382 = vrot.lane.b32.xlu0 %v80, 112
    %v383 = vpop.permute.xlu0 %382
    %384 = vrot.lane.b32.xlu0 %v83, 112
    %v385 = vpop.permute.xlu0 %384
    %386 = vrot.lane.b32.xlu0 %v86, 112
    %v387 = vpop.permute.xlu0 %386
    %v393 = vsel %vm132, %v378, 0
    %v396 = vsel %vm132, %v379, 0
    %398 = vmatpush.msra.mxu0 0.0
    %399 = vmatpush.msra.mxu0 0.0
    %400 = vmatpush.msra.mxu0 0.0
    %401 = vmatpush.msra.mxu0 0.0
    %402 = vmatpush.msra.mxu0 0.0
    %403 = vmatpush.msra.mxu0 0.0
    %404 = vmatpush.msra.mxu0 0.0
    %405 = vmatpush.msra.mxu0 0.0
    %406 = vmatpush.msra.mxu0 0.0
    %407 = vmatpush.msra.mxu0 0.0
    %408 = vmatpush.msra.mxu0 0.0
    %409 = vmatpush.msra.mxu0 0.0
    %410 = vmatpush.msra.mxu0 %v387
    %411 = vmatpush.msra.mxu0 %v385
    %412 = vmatpush.msra.mxu0 %v383
    %413 = vmatpush.msra.mxu0 %v381
    %414 = vmatmul.f32.gmra.mxu0 %v393
    %v415 = vpop.f32.mrf.mxu0
    %v416 = vadd.f32 0.0, %v415
    %417 = vmatmul.f32.gmra.mxu0 %v396
    %v418 = vpop.f32.mrf.mxu0
    %v419 = vadd.f32 0.0, %v418
    %420 = vdwg.mxu0
    %423 = vrot.lane.b32.xlu0 %v416, 16
    %v424 = vpop.permute.xlu0 %423
    %425 = vrot.lane.b32.xlu0 %v419, 16
    %v426 = vpop.permute.xlu0 %425
    %vm429 = vcmask 195712
    %430 = vst.msk [vmem:[#allocation2] sm:$0xff] %vm429, %v424
    %431 = vst.msk [vmem:[#allocation2 + $0x8] sm:$0xff] %vm429, %v426
    %432 = vrot.lane.b32.xlu0 %v59, 104
    %v433 = vpop.permute.xlu0 %432
    %434 = vrot.lane.b32.xlu0 %v62, 104
    %v435 = vpop.permute.xlu0 %434
    %436 = vrot.lane.b32.xlu0 %v65, 104
    %v437 = vpop.permute.xlu0 %436
    %438 = vrot.lane.b32.xlu0 %v68, 104
    %v439 = vpop.permute.xlu0 %438
    %440 = vrot.lane.b32.xlu0 %v71, 104
    %v441 = vpop.permute.xlu0 %440
    %442 = vrot.lane.b32.xlu0 %v74, 104
    %v443 = vpop.permute.xlu0 %442
    %v444 = vsel %vm90, %v433, 0
    %v446 = vsel %vm90, %v435, 0
    %v448 = vsel %vm90, %v437, 0
    %v450 = vsel %vm90, %v439, 0
    %v452 = vsel %vm90, %v441, 0
    %v454 = vsel %vm90, %v443, 0
    %456 = vmatpush.xpose.msra.mxu0 0.0
    %457 = vmatpush.xpose.msra.mxu0 0.0
    %458 = vmatpush.xpose.msra.mxu0 0.0
    %459 = vmatpush.xpose.msra.mxu0 0.0
    %460 = vmatpush.xpose.msra.mxu0 0.0
    %461 = vmatpush.xpose.msra.mxu0 0.0
    %462 = vmatpush.xpose.msra.mxu0 0.0
    %463 = vmatpush.xpose.msra.mxu0 0.0
    %464 = vmatpush.xpose.msra.mxu0 0.0
    %465 = vmatpush.xpose.msra.mxu0 0.0
    %466 = vmatpush.xpose.msra.mxu0 0.0
    %467 = vmatpush.xpose.msra.mxu0 0.0
    %468 = vmatpush.xpose.msra.mxu0 %v454
    %469 = vmatpush.xpose.msra.mxu0 %v452
    %470 = vmatpush.xpose.msra.mxu0 %v450
    %471 = vmatpush.xpose.msra.mxu0 %v448
    %472 = vmatmul.f32.gmra.mxu0 %v444
    %v473 = vpop.f32.mrf.mxu0
    %v474 = vadd.f32 %v88, %v473
    %475 = vmatmul.f32.gmra.mxu0 %v446
    %v476 = vpop.f32.mrf.mxu0
    %v477 = vadd.f32 %v89, %v476
    %478 = vdwg.mxu0
    %v479 = vsel %vm132, %v474, -inf
    %480 = vmax.xlane.f32.xlu0 %v479
    %v481 = vpop.xlane.xlu0 %480
    %v482 = vsel %vm132, %v477, -inf
    %483 = vmax.xlane.f32.xlu0 %v482
    %v484 = vpop.xlane.xlu0 %483
    %v485 = vsub.f32 %v474, %v481
    %v486 = vsub.f32 %v477, %v484
    %v487 = vmul.f32 %v485, 1.442695
    %v488 = vpow.pop %v487
    %v489 = vmul.f32 %v486, 1.442695
    %v490 = vpow.pop %v489
    %v491 = vsel %vm132, %v488, 0.0
    %492 = vadd.xlane.f32.xlu0 %v491
    %v493 = vpop.xlane.xlu0 %492
    %v494 = vsel %vm132, %v490, 0.0
    %495 = vadd.xlane.f32.xlu0 %v494
    %v496 = vpop.xlane.xlu0 %495
    %v497 = vrcp.pop %v493
    %v498 = vrcp.pop %v496
    %v499 = vmul.f32 %v488, %v497
    %v500 = vmul.f32 %v490, %v498
    %501 = vrot.lane.b32.xlu0 %v77, 104
    %v502 = vpop.permute.xlu0 %501
    %503 = vrot.lane.b32.xlu0 %v80, 104
    %v504 = vpop.permute.xlu0 %503
    %505 = vrot.lane.b32.xlu0 %v83, 104
    %v506 = vpop.permute.xlu0 %505
    %507 = vrot.lane.b32.xlu0 %v86, 104
    %v508 = vpop.permute.xlu0 %507
    %v514 = vsel %vm132, %v499, 0
    %v517 = vsel %vm132, %v500, 0
    %519 = vmatpush.msra.mxu0 0.0
    %520 = vmatpush.msra.mxu0 0.0
    %521 = vmatpush.msra.mxu0 0.0
    %522 = vmatpush.msra.mxu0 0.0
    %523 = vmatpush.msra.mxu0 0.0
    %524 = vmatpush.msra.mxu0 0.0
    %525 = vmatpush.msra.mxu0 0.0
    %526 = vmatpush.msra.mxu0 0.0
    %527 = vmatpush.msra.mxu0 0.0
    %528 = vmatpush.msra.mxu0 0.0
    %529 = vmatpush.msra.mxu0 0.0
    %530 = vmatpush.msra.mxu0 0.0
    %531 = vmatpush.msra.mxu0 %v508
    %532 = vmatpush.msra.mxu0 %v506
    %533 = vmatpush.msra.mxu0 %v504
    %534 = vmatpush.msra.mxu0 %v502
    %535 = vmatmul.f32.gmra.mxu0 %v514
    %v536 = vpop.f32.mrf.mxu0
    %v537 = vadd.f32 0.0, %v536
    %538 = vmatmul.f32.gmra.mxu0 %v517
    %v539 = vpop.f32.mrf.mxu0
    %v540 = vadd.f32 0.0, %v539
    %541 = vdwg.mxu0
    %544 = vrot.lane.b32.xlu0 %v537, 24
    %v545 = vpop.permute.xlu0 %544
    %546 = vrot.lane.b32.xlu0 %v540, 24
    %v547 = vpop.permute.xlu0 %546
    %vm550 = vcmask 261312
    %551 = vst.msk [vmem:[#allocation2] sm:$0xff] %vm550, %v545
    %552 = vst.msk [vmem:[#allocation2 + $0x8] sm:$0xff] %vm550, %v547
    %v553 = vld [vmem:[#allocation2] sm:$0xff]
    %v554 = vld [vmem:[#allocation2 + $0x8] sm:$0xff]
    %v555 = vld [vmem:[%s2 + $0x80] sm:$0xff]
    %v556 = vld [vmem:[%s2 + $0x88] sm:$0xff]
    %v557 = vld [vmem:[%s2 + $0x90] sm:$0xff]
    %v558 = vld [vmem:[%s2 + $0x98] sm:$0xff]
    %v559 = vld [vmem:[%s2 + $0x100] sm:$0xff]
    %v560 = vld [vmem:[%s2 + $0x108] sm:$0xff]
    %v562 = vsel %vm132, %v553, 0
    %v565 = vsel %vm132, %v554, 0
    %567 = vmatpush.msra.mxu0 0.0
    %568 = vmatpush.msra.mxu0 0.0
    %569 = vmatpush.msra.mxu0 0.0
    %570 = vmatpush.msra.mxu0 0.0
    %571 = vmatpush.msra.mxu0 0.0
    %572 = vmatpush.msra.mxu0 0.0
    %573 = vmatpush.msra.mxu0 0.0
    %574 = vmatpush.msra.mxu0 0.0
    %575 = vmatpush.msra.mxu0 0.0
    %576 = vmatpush.msra.mxu0 0.0
    %577 = vmatpush.msra.mxu0 0.0
    %578 = vmatpush.msra.mxu0 0.0
    %579 = vmatpush.msra.mxu0 %v558
    %580 = vmatpush.msra.mxu0 %v557
    %581 = vmatpush.msra.mxu0 %v556
    %582 = vmatpush.msra.mxu0 %v555
    %583 = vmatmul.f32.gmra.mxu0 %v562
    %v584 = vpop.f32.mrf.mxu0
    %v585 = vadd.f32 %v559, %v584
    %586 = vmatmul.f32.gmra.mxu0 %v565
    %v587 = vpop.f32.mrf.mxu0
    %v588 = vadd.f32 %v560, %v587
    %589 = vdwg.mxu0
    %v590 = vld [vmem:[%s0 + $0x50] sm:$0xff]
    %v591 = vld [vmem:[%s0 + $0x58] sm:$0xff]
    %v592 = vadd.f32 %v590, %v585
    %v593 = vadd.f32 %v591, %v588
    %v594 = vsel %vm132, %v592, 0.0
    %595 = vadd.xlane.f32.xlu0 %v594
    %v596 = vpop.xlane.xlu0 %595
    %v597 = vsel %vm132, %v593, 0.0
    %598 = vadd.xlane.f32.xlu0 %v597
    %v599 = vpop.xlane.xlu0 %598
    %v600 = vrcp.pop 32.0
    %v601 = vmul.f32 32.0, %v600
    %v602 = vsub.f32 1.0, %v601
    %v603 = vmul.f32 %v600, %v602
    %v604 = vadd.f32 %v600, %v603
    %vm605 = vweird.f32 %v600
    %v606 = vsel %vm605, %v600, %v604
    %v607 = vmul.f32 %v596, %v606
    %v608 = vmul.f32 %v599, %v606
    %v609 = vsub.f32 %v592, %v607
    %v610 = vsub.f32 %v593, %v608
    %v611 = vmul.f32 %v609, %v609
    %v612 = vmul.f32 %v610, %v610
    %v613 = vsel %vm132, %v611, 0.0
    %614 = vadd.xlane.f32.xlu0 %v613
    %v615 = vpop.xlane.xlu0 %614
    %v616 = vsel %vm132, %v612, 0.0
    %617 = vadd.xlane.f32.xlu0 %v616
    %v618 = vpop.xlane.xlu0 %617
    %v619 = vmul.f32 %v615, %v606
    %v620 = vmul.f32 %v618, %v606
    %v621 = vadd.f32 %v619, 1e-05
    %v622 = vadd.f32 %v620, 1e-05
    %v623 = vrsqrt.pop %v621
    %v624 = vmul.f32 %v623, %v621
    %v625 = vmul.f32 %v624, %v623
    %v626 = vmul.f32 0.5, %v625
    %v627 = vsub.f32 1.5, %v626
    %v628 = vmul.f32 %v623, %v627
    %vm629 = vweird.f32 %v621
    %vm630 = vweird.f32 %v623
    %vm631 = vmor %vm629, %vm630
    %v632 = vsel %vm631, %v623, %v628
    %v633 = vrsqrt.pop %v622
    %v634 = vmul.f32 %v633, %v622
    %v635 = vmul.f32 %v634, %v633
    %v636 = vmul.f32 0.5, %v635
    %v637 = vsub.f32 1.5, %v636
    %v638 = vmul.f32 %v633, %v637
    %vm639 = vweird.f32 %v622
    %vm640 = vweird.f32 %v633
    %vm641 = vmor %vm639, %vm640
    %v642 = vsel %vm641, %v633, %v638
    %v643 = vmul.f32 %v609, %v632
    %v644 = vmul.f32 %v610, %v642
    %v645 = vld [vmem:[%s2 + $0x130] sm:$0xff]
    %v646 = vld [vmem:[%s2 + $0x138] sm:$0xff]
    %v647 = vmul.f32 %v643, %v645
    %v648 = vmul.f32 %v644, %v646
    %v649 = vld [vmem:[%s2 + $0x140] sm:$0xff]
    %v650 = vld [vmem:[%s2 + $0x148] sm:$0xff]
    %v651 = vadd.f32 %v647, %v649
    %v652 = vadd.f32 %v648, %v650
    %v653 = vld [vmem:[%s2 + $0xa0] sm:$0xff]
    %v654 = vld [vmem:[%s2 + $0xa8] sm:$0xff]
    %v655 = vld [vmem:[%s2 + $0xb0] sm:$0xff]
    %v656 = vld [vmem:[%s2 + $0xb8] sm:$0xff]
    %v657 = vld [vmem:[%s2 + $0x110] sm:$0xff]
    %v658 = vld [vmem:[%s2 + $0x118] sm:$0xff]
    %v660 = vsel %vm132, %v651, 0
    %v663 = vsel %vm132, %v652, 0
    %665 = vmatpush.msra.mxu0 0.0
    %666 = vmatpush.msra.mxu0 0.0
    %667 = vmatpush.msra.mxu0 0.0
    %668 = vmatpush.msra.mxu0 0.0
    %669 = vmatpush.msra.mxu0 0.0
    %670 = vmatpush.msra.mxu0 0.0
    %671 = vmatpush.msra.mxu0 0.0
    %672 = vmatpush.msra.mxu0 0.0
    %673 = vmatpush.msra.mxu0 0.0
    %674 = vmatpush.msra.mxu0 0.0
    %675 = vmatpush.msra.mxu0 0.0
    %676 = vmatpush.msra.mxu0 0.0
    %677 = vmatpush.msra.mxu0 %v656
    %678 = vmatpush.msra.mxu0 %v655
    %679 = vmatpush.msra.mxu0 %v654
    %680 = vmatpush.msra.mxu0 %v653
    %681 = vmatmul.f32.gmra.mxu0 %v660
    %v682 = vpop.f32.mrf.mxu0
    %v683 = vadd.f32 %v657, %v682
    %684 = vmatmul.f32.gmra.mxu0 %v663
    %v685 = vpop.f32.mrf.mxu0
    %v686 = vadd.f32 %v658, %v685
    %687 = vdwg.mxu0
    %v688 = vmax.f32 %v683, 0.0
    %v689 = vmax.f32 %v686, 0.0
    %v690 = vld [vmem:[%s2 + $0xc0] sm:$0xff]
    %v691 = vld [vmem:[%s2 + $0xc8] sm:$0xff]
    %v692 = vld [vmem:[%s2 + $0xd0] sm:$0xff]
    %v693 = vld [vmem:[%s2 + $0xd8] sm:$0xff]
    %v694 = vld [vmem:[%s2 + $0xe0] sm:$0xff]
    %v695 = vld [vmem:[%s2 + $0xe8] sm:$0xff]
    %v696 = vld [vmem:[%s2 + $0xf0] sm:$0xff]
    %v697 = vld [vmem:[%s2 + $0xf8] sm:$0xff]
    %v698 = vld [vmem:[%s2 + $0x120] sm:$0xff]
    %v699 = vld [vmem:[%s2 + $0x128] sm:$0xff]
    %vm700 = vcmask 523264
    %v702 = vsel %vm700, %v688, 0
    %v705 = vsel %vm700, %v689, 0
    %707 = vmatpush.msra.mxu0 0.0
    %708 = vmatpush.msra.mxu0 0.0
    %709 = vmatpush.msra.mxu0 0.0
    %710 = vmatpush.msra.mxu0 0.0
    %711 = vmatpush.msra.mxu0 0.0
    %712 = vmatpush.msra.mxu0 0.0
    %713 = vmatpush.msra.mxu0 0.0
    %714 = vmatpush.msra.mxu0 0.0
    %715 = vmatpush.msra.mxu0 %v697
    %716 = vmatpush.msra.mxu0 %v696
    %717 = vmatpush.msra.mxu0 %v695
    %718 = vmatpush.msra.mxu0 %v694
    %719 = vmatpush.msra.mxu0 %v693
    %720 = vmatpush.msra.mxu0 %v692
    %721 = vmatpush.msra.mxu0 %v691
    %722 = vmatpush.msra.mxu0 %v690
    %723 = vmatmul.f32.gmra.mxu0 %v702
    %v724 = vpop.f32.mrf.mxu0
    %v725 = vadd.f32 %v698, %v724
    %726 = vmatmul.f32.gmra.mxu0 %v705
    %v727 = vpop.f32.mrf.mxu0
    %v728 = vadd.f32 %v699, %v727
    %729 = vdwg.mxu0
    %v730 = vadd.f32 %v651, %v725
    %v731 = vadd.f32 %v652, %v728
    %v732 = vsel %vm132, %v730, 0.0
    %733 = vadd.xlane.f32.xlu0 %v732
    %v734 = vpop.xlane.xlu0 %733
    %v735 = vsel %vm132, %v731, 0.0
    %736 = vadd.xlane.f32.xlu0 %v735
    %v737 = vpop.xlane.xlu0 %736
    %v738 = vmul.f32 %v734, %v606
    %v739 = vmul.f32 %v737, %v606
    %v740 = vsub.f32 %v730, %v738
    %v741 = vsub.f32 %v731, %v739
    %v742 = vmul.f32 %v740, %v740
    %v743 = vmul.f32 %v741, %v741
    %v744 = vsel %vm132, %v742, 0.0
    %745 = vadd.xlane.f32.xlu0 %v744
    %v746 = vpop.xlane.xlu0 %745
    %v747 = vsel %vm132, %v743, 0.0
    %748 = vadd.xlane.f32.xlu0 %v747
    %v749 = vpop.xlane.xlu0 %748
    %v750 = vmul.f32 %v746, %v606
    %v751 = vmul.f32 %v749, %v606
    %v752 = vadd.f32 %v750, 1e-05
    %v753 = vadd.f32 %v751, 1e-05
    %v754 = vrsqrt.pop %v752
    %v755 = vmul.f32 %v754, %v752
    %v756 = vmul.f32 %v755, %v754
    %v757 = vmul.f32 0.5, %v756
    %v758 = vsub.f32 1.5, %v757
    %v759 = vmul.f32 %v754, %v758
    %vm760 = vweird.f32 %v752
    %vm761 = vweird.f32 %v754
    %vm762 = vmor %vm760, %vm761
    %v763 = vsel %vm762, %v754, %v759
    %v764 = vrsqrt.pop %v753
    %v765 = vmul.f32 %v764, %v753
    %v766 = vmul.f32 %v765, %v764
    %v767 = vmul.f32 0.5, %v766
    %v768 = vsub.f32 1.5, %v767
    %v769 = vmul.f32 %v764, %v768
    %vm770 = vweird.f32 %v753
    %vm771 = vweird.f32 %v764
    %vm772 = vmor %vm770, %vm771
    %v773 = vsel %vm772, %v764, %v769
    %v774 = vmul.f32 %v740, %v763
    %v775 = vmul.f32 %v741, %v773
    %v776 = vld [vmem:[%s2 + $0x150] sm:$0xff]
    %v777 = vld [vmem:[%s2 + $0x158] sm:$0xff]
    %v778 = vmul.f32 %v774, %v776
    %v779 = vmul.f32 %v775, %v777
    %v780 = vld [vmem:[%s2 + $0x160] sm:$0xff]
    %v781 = vld [vmem:[%s2 + $0x168] sm:$0xff]
    %v782 = vadd.f32 %v778, %v780
    %v783 = vadd.f32 %v779, %v781
    %784 = vst.msk [vmem:[#allocation3] sm:$0xff] %vm132, %v782
    %785 = vst.msk [vmem:[#allocation3 + $0x8] sm:$0xff] %vm132, %v783
    // Predicated region
    $region14: #{transformer_decoder_layer.1} parent=1 // pred_check
      _
    $region15: #{transformer_decoder_layer.1} parent=1 // pred_check_branch
      %787 = sbr.rel (0) target = $region17
    $region16: #{transformer_decoder_layer.1} parent=1 // pred_region
      %789 = vsyncadd [#allocation4], 0
      %s790 = sshll.u32 [#allocation3], 4
      %s791 = int_to_ptr.vmem [resolvable:$true] %s790
      %s792 = sshll.u32 %s3, 4
      %s793 = int_to_ptr.hbm [resolvable:$true] %s792
      %798 = dma.vmem_to_hbm [thread:$0]  %s791, 256, %s793, [#allocation4], 128, 128, 8
    $region17: #{transformer_decoder_layer.1} parent=1 // pred_fallthru
      _
    // Predicated region
    $region18: #{transformer_decoder_layer.1} parent=1 // pred_check
      _
    $region19: #{transformer_decoder_layer.1} parent=1 // pred_check_branch
      %800 = sbr.rel (0) target = $region21
    $region20: #{transformer_decoder_layer.1} parent=1 // pred_region
      %802 = dma.done [#allocation4], 256
    $region21: #{transformer_decoder_layer.1} parent=1 // pred_fallthru
      _
    %803 = vsyncpa [#allocation4], 1

</llo_original>
